<compile_context>
chip_gen: v5e
topology: v5e:2x2
jax: 0.10.0
libtpu: 0.0.40
codegen_flags: <defaults>
</compile_context>

<pallas_src>
import functools

import jax
import jax.numpy as jnp
from jax.experimental import pallas as pl
from jax.experimental.pallas import tpu as pltpu  # noqa: F401  (kept for TPU-specific tuning hooks)


# ----------------------------------------------------------------------------
# Single fused kernel: LSTM recurrence + caption head + image head.
# ----------------------------------------------------------------------------
def fused_forward_kernel(cap_ref, img_ref,
                         w_ih_ref, w_hh_ref, lstm_b_ref,
                         cap_w_ref, cap_b_ref,
                         img_w_ref, img_b_ref,
                         cap_out_ref, img_out_ref):
    B, T, D = cap_ref.shape
    H = w_hh_ref.shape[0]

    # --- LSTM: hoist every timestep's input->gate contribution into one matmul
    x_all = cap_ref[...].reshape(B * T, D)                              # (B*T, D)
    gates_x = (jnp.dot(x_all, w_ih_ref[...],
                       preferred_element_type=jnp.float32)
               + lstm_b_ref[...])                                        # (B*T, 4H)
    gates_x = gates_x.reshape(B, T, 4 * H)                               # (B, T, 4H)

    h = jnp.zeros((B, H), jnp.float32)
    c = jnp.zeros((B, H), jnp.float32)

    # Serial recurrence, statically unrolled (T is small & known at trace time).
    # One MXU push (h @ W_hh^T) per step; PyTorch gate order i, f, g, o.
    for t in range(T):
        gates = gates_x[:, t, :] + jnp.dot(
            h, w_hh_ref[...], preferred_element_type=jnp.float32)        # (B, 4H)
        i_g = jax.nn.sigmoid(gates[:, 0 * H:1 * H])
        f_g = jax.nn.sigmoid(gates[:, 1 * H:2 * H])
        g_g = jnp.tanh(gates[:, 2 * H:3 * H])
        o_g = jax.nn.sigmoid(gates[:, 3 * H:4 * H])
        c = f_g * c + i_g * g_g
        h = o_g * jnp.tanh(c)

    # --- caption head: Linear + L2 normalize (== F.normalize, eps=1e-12) ---
    cap_y = (jnp.dot(h, cap_w_ref[...], preferred_element_type=jnp.float32)
             + cap_b_ref[...])
    cap_ss = jnp.maximum(jnp.sum(cap_y * cap_y, axis=1, keepdims=True), 1e-24)
    cap_out_ref[...] = (cap_y * jax.lax.rsqrt(cap_ss)).astype(cap_out_ref.dtype)

    # --- image head: Linear + L2 normalize ---
    img_y = (jnp.dot(img_ref[...], img_w_ref[...],
                     preferred_element_type=jnp.float32)
             + img_b_ref[...])
    img_ss = jnp.maximum(jnp.sum(img_y * img_y, axis=1, keepdims=True), 1e-24)
    img_out_ref[...] = (img_y * jax.lax.rsqrt(img_ss)).astype(img_out_ref.dtype)


def joint_embedding_forward(captions, image_features, params):
    """captions: (B, T, D) batch_first; image_features: (B, IMG).
    Returns (cap_emb, img_emb), each (B, LATENT) with unit L2 rows."""
    B, T, D = captions.shape
    H = params["w_hh_t"].shape[0]
    L = params["cap_w_t"].shape[1]
    IMG = params["img_w_t"].shape[0]

    def full(shape):
        # Whole-array block (last two dims equal full dims -> (8,128) rule ok).
        return pl.BlockSpec(shape, lambda: (0,) * len(shape))

    cap_emb, img_emb = pl.pallas_call(
        fused_forward_kernel,
        grid=(),
        out_shape=(jax.ShapeDtypeStruct((B, L), jnp.float32),
                   jax.ShapeDtypeStruct((B, L), jnp.float32)),
        in_specs=[
            full((B, T, D)),          # captions
            full((B, IMG)),           # image features
            full((D, 4 * H)),         # W_ih^T
            full((H, 4 * H)),         # W_hh^T
            full((1, 4 * H)),         # combined LSTM bias
            full((H, L)),             # caption_linear weight^T
            full((1, L)),             # caption_linear bias
            full((IMG, L)),           # image_feature_linear weight^T
            full((1, L)),             # image_feature_linear bias
        ],
        out_specs=(full((B, L)), full((B, L))),
    )(captions.astype(jnp.float32), image_features.astype(jnp.float32),
      params["w_ih_t"], params["w_hh_t"], params["lstm_b"],
      params["cap_w_t"], params["cap_b"],
      params["img_w_t"], params["img_b"])
    return cap_emb, img_emb


# ----------------------------------------------------------------------------
# Parameter init (deterministic, mirrors the PyTorch module's init scheme).
# ----------------------------------------------------------------------------
def xavier_uniform(key, shape):
    fan_out, fan_in = shape
    bound = jnp.sqrt(6.0 / (fan_in + fan_out))
    return jax.random.uniform(key, shape, jnp.float32, -bound, bound)


def init_params(key, sent_dim, hidden, latent, image_dim):
    k = jax.random.split(key, 6)
    stdv = 1.0 / jnp.sqrt(hidden)
    # LSTM weights in PyTorch layout: (4H, D) and (4H, H), gate order i,f,g,o.
    w_ih = jax.random.uniform(k[0], (4 * hidden, sent_dim), jnp.float32, -stdv, stdv)
    w_hh = jax.random.uniform(k[1], (4 * hidden, hidden), jnp.float32, -stdv, stdv)
    b_ih = jax.random.uniform(k[2], (4 * hidden,), jnp.float32, -stdv, stdv)
    b_hh = jax.random.uniform(k[3], (4 * hidden,), jnp.float32, -stdv, stdv)
    # Linear layers: xavier_uniform weights, zero bias (initialize_weights()).
    cap_w = xavier_uniform(k[4], (latent, hidden))        # (out, in)
    img_w = xavier_uniform(k[5], (latent, image_dim))     # (out, in)
    return dict(
        w_ih_t=w_ih.T,                                    # (D, 4H)
        w_hh_t=w_hh.T,                                    # (H, 4H)
        lstm_b=(b_ih + b_hh)[None, :],                    # (1, 4H)
        cap_w_t=cap_w.T, cap_b=jnp.zeros((1, latent), jnp.float32),
        img_w_t=img_w.T, img_b=jnp.zeros((1, latent), jnp.float32),
    )


@jax.jit
def model_forward(params, captions, image_features):
    # == Model.forward(captions, image_features) -> (cap_emb, img_emb)
    return joint_embedding_forward(captions, image_features, params)


if __name__ == "__main__":
    # Small, config-consistent shapes.
    B = 2          # batch
    T = 8          # sequence length
    SENT_DIM = 32  # config['sentence_embedding_size']
    HIDDEN = 32    # config['lstm_hidden_size']
    LATENT = 32    # config['joint_embedding_latent_space_dimension']
    IMG_DIM = 64   # config['image_dimension']

    key = jax.random.PRNGKey(0)
    kp, kc, ki = jax.random.split(key, 3)
    params = init_params(kp, SENT_DIM, HIDDEN, LATENT, IMG_DIM)

    captions = jax.random.normal(kc, (B, T, SENT_DIM), jnp.float32)
    image_features = jax.random.normal(ki, (B, IMG_DIM), jnp.float32)

    cap_emb, img_emb = model_forward(params, captions, image_features)
    jax.block_until_ready((cap_emb, img_emb))

    assert cap_emb.shape == (B, LATENT) and img_emb.shape == (B, LATENT)
    # Rows should be unit-norm after the F.normalize equivalent.
    assert bool(jnp.allclose(jnp.linalg.norm(cap_emb, axis=1), 1.0, atol=1e-4))
    assert bool(jnp.allclose(jnp.linalg.norm(img_emb, axis=1), 1.0, atol=1e-4))
    print("KERNEL_OK")
</pallas_src>

<mosaic_0001>
module attributes {stable_mosaic.version = 11 : i64} {
  func.func @fused_forward_kernel(%arg0: memref<2x8x32xf32, #tpu.memory_space<vmem>>, %arg1: memref<2x64xf32, #tpu.memory_space<vmem>>, %arg2: memref<32x128xf32, #tpu.memory_space<vmem>>, %arg3: memref<32x128xf32, #tpu.memory_space<vmem>>, %arg4: memref<1x128xf32, #tpu.memory_space<vmem>>, %arg5: memref<32x32xf32, #tpu.memory_space<vmem>>, %arg6: memref<1x32xf32, #tpu.memory_space<vmem>>, %arg7: memref<64x32xf32, #tpu.memory_space<vmem>>, %arg8: memref<1x32xf32, #tpu.memory_space<vmem>>, %arg9: memref<2x32xf32, #tpu.memory_space<vmem>>, %arg10: memref<2x32xf32, #tpu.memory_space<vmem>>) attributes {dimension_semantics = [], scalar_prefetch = 0 : i64, scratch_operands = 0 : i64, tpu.core_type = #tpu.core_type<tc>} {
    %c0 = arith.constant 0 : index
    %c0_0 = arith.constant 0 : index
    %c0_1 = arith.constant 0 : index
    %0 = vector.load %arg0[%c0, %c0_0, %c0_1] : memref<2x8x32xf32, #tpu.memory_space<vmem>>, vector<2x8x32xf32>
    %1 = vector.shape_cast %0 : vector<2x8x32xf32> to vector<16x32xf32>
    %c0_2 = arith.constant 0 : index
    %c0_3 = arith.constant 0 : index
    %2 = vector.load %arg2[%c0_2, %c0_3] : memref<32x128xf32, #tpu.memory_space<vmem>>, vector<32x128xf32>
    %cst = arith.constant dense<0.000000e+00> : vector<16x128xf32>
    %3 = tpu.matmul %1, %2, %cst {dimension_numbers = #tpu.dot_dimension_numbers<[1], [0], [0], [1], [0, 0, 1, 1], [], []>} : vector<16x32xf32>, vector<32x128xf32>, vector<16x128xf32> -> vector<16x128xf32>
    %c0_4 = arith.constant 0 : index
    %c0_5 = arith.constant 0 : index
    %4 = vector.load %arg4[%c0_4, %c0_5] : memref<1x128xf32, #tpu.memory_space<vmem>>, vector<1x128xf32>
    %5 = vector.broadcast %4 : vector<1x128xf32> to vector<16x128xf32>
    %6 = arith.addf %3, %5 : vector<16x128xf32>
    %7 = vector.shape_cast %6 : vector<16x128xf32> to vector<2x8x128xf32>
    %cst_6 = arith.constant 0.000000e+00 : f32
    %8 = vector.broadcast %cst_6 : f32 to vector<2x32xf32>
    %cst_7 = arith.constant 0.000000e+00 : f32
    %9 = vector.broadcast %cst_7 : f32 to vector<2x32xf32>
    %10 = vector.extract_strided_slice %7 {offsets = [0, 0, 0], sizes = [2, 1, 128], strides = [1, 1, 1]} : vector<2x8x128xf32> to vector<2x1x128xf32>
    %11 = vector.shape_cast %10 : vector<2x1x128xf32> to vector<2x128xf32>
    %c0_8 = arith.constant 0 : index
    %c0_9 = arith.constant 0 : index
    %12 = vector.load %arg3[%c0_8, %c0_9] : memref<32x128xf32, #tpu.memory_space<vmem>>, vector<32x128xf32>
    %cst_10 = arith.constant dense<0.000000e+00> : vector<2x128xf32>
    %13 = tpu.matmul %8, %12, %cst_10 {dimension_numbers = #tpu.dot_dimension_numbers<[1], [0], [0], [1], [0, 0, 1, 1], [], []>} : vector<2x32xf32>, vector<32x128xf32>, vector<2x128xf32> -> vector<2x128xf32>
    %14 = arith.addf %11, %13 : vector<2x128xf32>
    %15 = vector.extract_strided_slice %14 {offsets = [0, 0], sizes = [2, 32], strides = [1, 1]} : vector<2x128xf32> to vector<2x32xf32>
    %16 = arith.negf %15 : vector<2x32xf32>
    %17 = math.exp %16 : vector<2x32xf32>
    %cst_11 = arith.constant 1.000000e+00 : f32
    %18 = vector.broadcast %cst_11 : f32 to vector<2x32xf32>
    %19 = arith.addf %18, %17 : vector<2x32xf32>
    %20 = arith.divf %18, %19 : vector<2x32xf32>
    %21 = vector.extract_strided_slice %14 {offsets = [0, 32], sizes = [2, 32], strides = [1, 1]} : vector<2x128xf32> to vector<2x32xf32>
    %22 = arith.negf %21 : vector<2x32xf32>
    %23 = math.exp %22 : vector<2x32xf32>
    %cst_12 = arith.constant 1.000000e+00 : f32
    %24 = vector.broadcast %cst_12 : f32 to vector<2x32xf32>
    %25 = arith.addf %24, %23 : vector<2x32xf32>
    %26 = arith.divf %24, %25 : vector<2x32xf32>
    %27 = vector.extract_strided_slice %14 {offsets = [0, 64], sizes = [2, 32], strides = [1, 1]} : vector<2x128xf32> to vector<2x32xf32>
    %28 = math.tanh %27 : vector<2x32xf32>
    %29 = vector.extract_strided_slice %14 {offsets = [0, 96], sizes = [2, 32], strides = [1, 1]} : vector<2x128xf32> to vector<2x32xf32>
    %30 = arith.negf %29 : vector<2x32xf32>
    %31 = math.exp %30 : vector<2x32xf32>
    %cst_13 = arith.constant 1.000000e+00 : f32
    %32 = vector.broadcast %cst_13 : f32 to vector<2x32xf32>
    %33 = arith.addf %32, %31 : vector<2x32xf32>
    %34 = arith.divf %32, %33 : vector<2x32xf32>
    %35 = arith.mulf %26, %9 : vector<2x32xf32>
    %36 = arith.mulf %20, %28 : vector<2x32xf32>
    %37 = arith.addf %35, %36 : vector<2x32xf32>
    %38 = math.tanh %37 : vector<2x32xf32>
    %39 = arith.mulf %34, %38 : vector<2x32xf32>
    %40 = vector.extract_strided_slice %7 {offsets = [0, 1, 0], sizes = [2, 1, 128], strides = [1, 1, 1]} : vector<2x8x128xf32> to vector<2x1x128xf32>
    %41 = vector.shape_cast %40 : vector<2x1x128xf32> to vector<2x128xf32>
    %c0_14 = arith.constant 0 : index
    %c0_15 = arith.constant 0 : index
    %42 = vector.load %arg3[%c0_14, %c0_15] : memref<32x128xf32, #tpu.memory_space<vmem>>, vector<32x128xf32>
    %cst_16 = arith.constant dense<0.000000e+00> : vector<2x128xf32>
    %43 = tpu.matmul %39, %42, %cst_16 {dimension_numbers = #tpu.dot_dimension_numbers<[1], [0], [0], [1], [0, 0, 1, 1], [], []>} : vector<2x32xf32>, vector<32x128xf32>, vector<2x128xf32> -> vector<2x128xf32>
    %44 = arith.addf %41, %43 : vector<2x128xf32>
    %45 = vector.extract_strided_slice %44 {offsets = [0, 0], sizes = [2, 32], strides = [1, 1]} : vector<2x128xf32> to vector<2x32xf32>
    %46 = arith.negf %45 : vector<2x32xf32>
    %47 = math.exp %46 : vector<2x32xf32>
    %cst_17 = arith.constant 1.000000e+00 : f32
    %48 = vector.broadcast %cst_17 : f32 to vector<2x32xf32>
    %49 = arith.addf %48, %47 : vector<2x32xf32>
    %50 = arith.divf %48, %49 : vector<2x32xf32>
    %51 = vector.extract_strided_slice %44 {offsets = [0, 32], sizes = [2, 32], strides = [1, 1]} : vector<2x128xf32> to vector<2x32xf32>
    %52 = arith.negf %51 : vector<2x32xf32>
    %53 = math.exp %52 : vector<2x32xf32>
    %cst_18 = arith.constant 1.000000e+00 : f32
    %54 = vector.broadcast %cst_18 : f32 to vector<2x32xf32>
    %55 = arith.addf %54, %53 : vector<2x32xf32>
    %56 = arith.divf %54, %55 : vector<2x32xf32>
    %57 = vector.extract_strided_slice %44 {offsets = [0, 64], sizes = [2, 32], strides = [1, 1]} : vector<2x128xf32> to vector<2x32xf32>
    %58 = math.tanh %57 : vector<2x32xf32>
    %59 = vector.extract_strided_slice %44 {offsets = [0, 96], sizes = [2, 32], strides = [1, 1]} : vector<2x128xf32> to vector<2x32xf32>
    %60 = arith.negf %59 : vector<2x32xf32>
    %61 = math.exp %60 : vector<2x32xf32>
    %cst_19 = arith.constant 1.000000e+00 : f32
    %62 = vector.broadcast %cst_19 : f32 to vector<2x32xf32>
    %63 = arith.addf %62, %61 : vector<2x32xf32>
    %64 = arith.divf %62, %63 : vector<2x32xf32>
    %65 = arith.mulf %56, %37 : vector<2x32xf32>
    %66 = arith.mulf %50, %58 : vector<2x32xf32>
    %67 = arith.addf %65, %66 : vector<2x32xf32>
    %68 = math.tanh %67 : vector<2x32xf32>
    %69 = arith.mulf %64, %68 : vector<2x32xf32>
    %70 = vector.extract_strided_slice %7 {offsets = [0, 2, 0], sizes = [2, 1, 128], strides = [1, 1, 1]} : vector<2x8x128xf32> to vector<2x1x128xf32>
    %71 = vector.shape_cast %70 : vector<2x1x128xf32> to vector<2x128xf32>
    %c0_20 = arith.constant 0 : index
    %c0_21 = arith.constant 0 : index
    %72 = vector.load %arg3[%c0_20, %c0_21] : memref<32x128xf32, #tpu.memory_space<vmem>>, vector<32x128xf32>
    %cst_22 = arith.constant dense<0.000000e+00> : vector<2x128xf32>
    %73 = tpu.matmul %69, %72, %cst_22 {dimension_numbers = #tpu.dot_dimension_numbers<[1], [0], [0], [1], [0, 0, 1, 1], [], []>} : vector<2x32xf32>, vector<32x128xf32>, vector<2x128xf32> -> vector<2x128xf32>
    %74 = arith.addf %71, %73 : vector<2x128xf32>
    %75 = vector.extract_strided_slice %74 {offsets = [0, 0], sizes = [2, 32], strides = [1, 1]} : vector<2x128xf32> to vector<2x32xf32>
    %76 = arith.negf %75 : vector<2x32xf32>
    %77 = math.exp %76 : vector<2x32xf32>
    %cst_23 = arith.constant 1.000000e+00 : f32
    %78 = vector.broadcast %cst_23 : f32 to vector<2x32xf32>
    %79 = arith.addf %78, %77 : vector<2x32xf32>
    %80 = arith.divf %78, %79 : vector<2x32xf32>
    %81 = vector.extract_strided_slice %74 {offsets = [0, 32], sizes = [2, 32], strides = [1, 1]} : vector<2x128xf32> to vector<2x32xf32>
    %82 = arith.negf %81 : vector<2x32xf32>
    %83 = math.exp %82 : vector<2x32xf32>
    %cst_24 = arith.constant 1.000000e+00 : f32
    %84 = vector.broadcast %cst_24 : f32 to vector<2x32xf32>
    %85 = arith.addf %84, %83 : vector<2x32xf32>
    %86 = arith.divf %84, %85 : vector<2x32xf32>
    %87 = vector.extract_strided_slice %74 {offsets = [0, 64], sizes = [2, 32], strides = [1, 1]} : vector<2x128xf32> to vector<2x32xf32>
    %88 = math.tanh %87 : vector<2x32xf32>
    %89 = vector.extract_strided_slice %74 {offsets = [0, 96], sizes = [2, 32], strides = [1, 1]} : vector<2x128xf32> to vector<2x32xf32>
    %90 = arith.negf %89 : vector<2x32xf32>
    %91 = math.exp %90 : vector<2x32xf32>
    %cst_25 = arith.constant 1.000000e+00 : f32
    %92 = vector.broadcast %cst_25 : f32 to vector<2x32xf32>
    %93 = arith.addf %92, %91 : vector<2x32xf32>
    %94 = arith.divf %92, %93 : vector<2x32xf32>
    %95 = arith.mulf %86, %67 : vector<2x32xf32>
    %96 = arith.mulf %80, %88 : vector<2x32xf32>
    %97 = arith.addf %95, %96 : vector<2x32xf32>
    %98 = math.tanh %97 : vector<2x32xf32>
    %99 = arith.mulf %94, %98 : vector<2x32xf32>
    %100 = vector.extract_strided_slice %7 {offsets = [0, 3, 0], sizes = [2, 1, 128], strides = [1, 1, 1]} : vector<2x8x128xf32> to vector<2x1x128xf32>
    %101 = vector.shape_cast %100 : vector<2x1x128xf32> to vector<2x128xf32>
    %c0_26 = arith.constant 0 : index
    %c0_27 = arith.constant 0 : index
    %102 = vector.load %arg3[%c0_26, %c0_27] : memref<32x128xf32, #tpu.memory_space<vmem>>, vector<32x128xf32>
    %cst_28 = arith.constant dense<0.000000e+00> : vector<2x128xf32>
    %103 = tpu.matmul %99, %102, %cst_28 {dimension_numbers = #tpu.dot_dimension_numbers<[1], [0], [0], [1], [0, 0, 1, 1], [], []>} : vector<2x32xf32>, vector<32x128xf32>, vector<2x128xf32> -> vector<2x128xf32>
    %104 = arith.addf %101, %103 : vector<2x128xf32>
    %105 = vector.extract_strided_slice %104 {offsets = [0, 0], sizes = [2, 32], strides = [1, 1]} : vector<2x128xf32> to vector<2x32xf32>
    %106 = arith.negf %105 : vector<2x32xf32>
    %107 = math.exp %106 : vector<2x32xf32>
    %cst_29 = arith.constant 1.000000e+00 : f32
    %108 = vector.broadcast %cst_29 : f32 to vector<2x32xf32>
    %109 = arith.addf %108, %107 : vector<2x32xf32>
    %110 = arith.divf %108, %109 : vector<2x32xf32>
    %111 = vector.extract_strided_slice %104 {offsets = [0, 32], sizes = [2, 32], strides = [1, 1]} : vector<2x128xf32> to vector<2x32xf32>
    %112 = arith.negf %111 : vector<2x32xf32>
    %113 = math.exp %112 : vector<2x32xf32>
    %cst_30 = arith.constant 1.000000e+00 : f32
    %114 = vector.broadcast %cst_30 : f32 to vector<2x32xf32>
    %115 = arith.addf %114, %113 : vector<2x32xf32>
    %116 = arith.divf %114, %115 : vector<2x32xf32>
    %117 = vector.extract_strided_slice %104 {offsets = [0, 64], sizes = [2, 32], strides = [1, 1]} : vector<2x128xf32> to vector<2x32xf32>
    %118 = math.tanh %117 : vector<2x32xf32>
    %119 = vector.extract_strided_slice %104 {offsets = [0, 96], sizes = [2, 32], strides = [1, 1]} : vector<2x128xf32> to vector<2x32xf32>
    %120 = arith.negf %119 : vector<2x32xf32>
    %121 = math.exp %120 : vector<2x32xf32>
    %cst_31 = arith.constant 1.000000e+00 : f32
    %122 = vector.broadcast %cst_31 : f32 to vector<2x32xf32>
    %123 = arith.addf %122, %121 : vector<2x32xf32>
    %124 = arith.divf %122, %123 : vector<2x32xf32>
    %125 = arith.mulf %116, %97 : vector<2x32xf32>
    %126 = arith.mulf %110, %118 : vector<2x32xf32>
    %127 = arith.addf %125, %126 : vector<2x32xf32>
    %128 = math.tanh %127 : vector<2x32xf32>
    %129 = arith.mulf %124, %128 : vector<2x32xf32>
    %130 = vector.extract_strided_slice %7 {offsets = [0, 4, 0], sizes = [2, 1, 128], strides = [1, 1, 1]} : vector<2x8x128xf32> to vector<2x1x128xf32>
    %131 = vector.shape_cast %130 : vector<2x1x128xf32> to vector<2x128xf32>
    %c0_32 = arith.constant 0 : index
    %c0_33 = arith.constant 0 : index
    %132 = vector.load %arg3[%c0_32, %c0_33] : memref<32x128xf32, #tpu.memory_space<vmem>>, vector<32x128xf32>
    %cst_34 = arith.constant dense<0.000000e+00> : vector<2x128xf32>
    %133 = tpu.matmul %129, %132, %cst_34 {dimension_numbers = #tpu.dot_dimension_numbers<[1], [0], [0], [1], [0, 0, 1, 1], [], []>} : vector<2x32xf32>, vector<32x128xf32>, vector<2x128xf32> -> vector<2x128xf32>
    %134 = arith.addf %131, %133 : vector<2x128xf32>
    %135 = vector.extract_strided_slice %134 {offsets = [0, 0], sizes = [2, 32], strides = [1, 1]} : vector<2x128xf32> to vector<2x32xf32>
    %136 = arith.negf %135 : vector<2x32xf32>
    %137 = math.exp %136 : vector<2x32xf32>
    %cst_35 = arith.constant 1.000000e+00 : f32
    %138 = vector.broadcast %cst_35 : f32 to vector<2x32xf32>
    %139 = arith.addf %138, %137 : vector<2x32xf32>
    %140 = arith.divf %138, %139 : vector<2x32xf32>
    %141 = vector.extract_strided_slice %134 {offsets = [0, 32], sizes = [2, 32], strides = [1, 1]} : vector<2x128xf32> to vector<2x32xf32>
    %142 = arith.negf %141 : vector<2x32xf32>
    %143 = math.exp %142 : vector<2x32xf32>
    %cst_36 = arith.constant 1.000000e+00 : f32
    %144 = vector.broadcast %cst_36 : f32 to vector<2x32xf32>
    %145 = arith.addf %144, %143 : vector<2x32xf32>
    %146 = arith.divf %144, %145 : vector<2x32xf32>
    %147 = vector.extract_strided_slice %134 {offsets = [0, 64], sizes = [2, 32], strides = [1, 1]} : vector<2x128xf32> to vector<2x32xf32>
    %148 = math.tanh %147 : vector<2x32xf32>
    %149 = vector.extract_strided_slice %134 {offsets = [0, 96], sizes = [2, 32], strides = [1, 1]} : vector<2x128xf32> to vector<2x32xf32>
    %150 = arith.negf %149 : vector<2x32xf32>
    %151 = math.exp %150 : vector<2x32xf32>
    %cst_37 = arith.constant 1.000000e+00 : f32
    %152 = vector.broadcast %cst_37 : f32 to vector<2x32xf32>
    %153 = arith.addf %152, %151 : vector<2x32xf32>
    %154 = arith.divf %152, %153 : vector<2x32xf32>
    %155 = arith.mulf %146, %127 : vector<2x32xf32>
    %156 = arith.mulf %140, %148 : vector<2x32xf32>
    %157 = arith.addf %155, %156 : vector<2x32xf32>
    %158 = math.tanh %157 : vector<2x32xf32>
    %159 = arith.mulf %154, %158 : vector<2x32xf32>
    %160 = vector.extract_strided_slice %7 {offsets = [0, 5, 0], sizes = [2, 1, 128], strides = [1, 1, 1]} : vector<2x8x128xf32> to vector<2x1x128xf32>
    %161 = vector.shape_cast %160 : vector<2x1x128xf32> to vector<2x128xf32>
    %c0_38 = arith.constant 0 : index
    %c0_39 = arith.constant 0 : index
    %162 = vector.load %arg3[%c0_38, %c0_39] : memref<32x128xf32, #tpu.memory_space<vmem>>, vector<32x128xf32>
    %cst_40 = arith.constant dense<0.000000e+00> : vector<2x128xf32>
    %163 = tpu.matmul %159, %162, %cst_40 {dimension_numbers = #tpu.dot_dimension_numbers<[1], [0], [0], [1], [0, 0, 1, 1], [], []>} : vector<2x32xf32>, vector<32x128xf32>, vector<2x128xf32> -> vector<2x128xf32>
    %164 = arith.addf %161, %163 : vector<2x128xf32>
    %165 = vector.extract_strided_slice %164 {offsets = [0, 0], sizes = [2, 32], strides = [1, 1]} : vector<2x128xf32> to vector<2x32xf32>
    %166 = arith.negf %165 : vector<2x32xf32>
    %167 = math.exp %166 : vector<2x32xf32>
    %cst_41 = arith.constant 1.000000e+00 : f32
    %168 = vector.broadcast %cst_41 : f32 to vector<2x32xf32>
    %169 = arith.addf %168, %167 : vector<2x32xf32>
    %170 = arith.divf %168, %169 : vector<2x32xf32>
    %171 = vector.extract_strided_slice %164 {offsets = [0, 32], sizes = [2, 32], strides = [1, 1]} : vector<2x128xf32> to vector<2x32xf32>
    %172 = arith.negf %171 : vector<2x32xf32>
    %173 = math.exp %172 : vector<2x32xf32>
    %cst_42 = arith.constant 1.000000e+00 : f32
    %174 = vector.broadcast %cst_42 : f32 to vector<2x32xf32>
    %175 = arith.addf %174, %173 : vector<2x32xf32>
    %176 = arith.divf %174, %175 : vector<2x32xf32>
    %177 = vector.extract_strided_slice %164 {offsets = [0, 64], sizes = [2, 32], strides = [1, 1]} : vector<2x128xf32> to vector<2x32xf32>
    %178 = math.tanh %177 : vector<2x32xf32>
    %179 = vector.extract_strided_slice %164 {offsets = [0, 96], sizes = [2, 32], strides = [1, 1]} : vector<2x128xf32> to vector<2x32xf32>
    %180 = arith.negf %179 : vector<2x32xf32>
    %181 = math.exp %180 : vector<2x32xf32>
    %cst_43 = arith.constant 1.000000e+00 : f32
    %182 = vector.broadcast %cst_43 : f32 to vector<2x32xf32>
    %183 = arith.addf %182, %181 : vector<2x32xf32>
    %184 = arith.divf %182, %183 : vector<2x32xf32>
    %185 = arith.mulf %176, %157 : vector<2x32xf32>
    %186 = arith.mulf %170, %178 : vector<2x32xf32>
    %187 = arith.addf %185, %186 : vector<2x32xf32>
    %188 = math.tanh %187 : vector<2x32xf32>
    %189 = arith.mulf %184, %188 : vector<2x32xf32>
    %190 = vector.extract_strided_slice %7 {offsets = [0, 6, 0], sizes = [2, 1, 128], strides = [1, 1, 1]} : vector<2x8x128xf32> to vector<2x1x128xf32>
    %191 = vector.shape_cast %190 : vector<2x1x128xf32> to vector<2x128xf32>
    %c0_44 = arith.constant 0 : index
    %c0_45 = arith.constant 0 : index
    %192 = vector.load %arg3[%c0_44, %c0_45] : memref<32x128xf32, #tpu.memory_space<vmem>>, vector<32x128xf32>
    %cst_46 = arith.constant dense<0.000000e+00> : vector<2x128xf32>
    %193 = tpu.matmul %189, %192, %cst_46 {dimension_numbers = #tpu.dot_dimension_numbers<[1], [0], [0], [1], [0, 0, 1, 1], [], []>} : vector<2x32xf32>, vector<32x128xf32>, vector<2x128xf32> -> vector<2x128xf32>
    %194 = arith.addf %191, %193 : vector<2x128xf32>
    %195 = vector.extract_strided_slice %194 {offsets = [0, 0], sizes = [2, 32], strides = [1, 1]} : vector<2x128xf32> to vector<2x32xf32>
    %196 = arith.negf %195 : vector<2x32xf32>
    %197 = math.exp %196 : vector<2x32xf32>
    %cst_47 = arith.constant 1.000000e+00 : f32
    %198 = vector.broadcast %cst_47 : f32 to vector<2x32xf32>
    %199 = arith.addf %198, %197 : vector<2x32xf32>
    %200 = arith.divf %198, %199 : vector<2x32xf32>
    %201 = vector.extract_strided_slice %194 {offsets = [0, 32], sizes = [2, 32], strides = [1, 1]} : vector<2x128xf32> to vector<2x32xf32>
    %202 = arith.negf %201 : vector<2x32xf32>
    %203 = math.exp %202 : vector<2x32xf32>
    %cst_48 = arith.constant 1.000000e+00 : f32
    %204 = vector.broadcast %cst_48 : f32 to vector<2x32xf32>
    %205 = arith.addf %204, %203 : vector<2x32xf32>
    %206 = arith.divf %204, %205 : vector<2x32xf32>
    %207 = vector.extract_strided_slice %194 {offsets = [0, 64], sizes = [2, 32], strides = [1, 1]} : vector<2x128xf32> to vector<2x32xf32>
    %208 = math.tanh %207 : vector<2x32xf32>
    %209 = vector.extract_strided_slice %194 {offsets = [0, 96], sizes = [2, 32], strides = [1, 1]} : vector<2x128xf32> to vector<2x32xf32>
    %210 = arith.negf %209 : vector<2x32xf32>
    %211 = math.exp %210 : vector<2x32xf32>
    %cst_49 = arith.constant 1.000000e+00 : f32
    %212 = vector.broadcast %cst_49 : f32 to vector<2x32xf32>
    %213 = arith.addf %212, %211 : vector<2x32xf32>
    %214 = arith.divf %212, %213 : vector<2x32xf32>
    %215 = arith.mulf %206, %187 : vector<2x32xf32>
    %216 = arith.mulf %200, %208 : vector<2x32xf32>
    %217 = arith.addf %215, %216 : vector<2x32xf32>
    %218 = math.tanh %217 : vector<2x32xf32>
    %219 = arith.mulf %214, %218 : vector<2x32xf32>
    %220 = vector.extract_strided_slice %7 {offsets = [0, 7, 0], sizes = [2, 1, 128], strides = [1, 1, 1]} : vector<2x8x128xf32> to vector<2x1x128xf32>
    %221 = vector.shape_cast %220 : vector<2x1x128xf32> to vector<2x128xf32>
    %c0_50 = arith.constant 0 : index
    %c0_51 = arith.constant 0 : index
    %222 = vector.load %arg3[%c0_50, %c0_51] : memref<32x128xf32, #tpu.memory_space<vmem>>, vector<32x128xf32>
    %cst_52 = arith.constant dense<0.000000e+00> : vector<2x128xf32>
    %223 = tpu.matmul %219, %222, %cst_52 {dimension_numbers = #tpu.dot_dimension_numbers<[1], [0], [0], [1], [0, 0, 1, 1], [], []>} : vector<2x32xf32>, vector<32x128xf32>, vector<2x128xf32> -> vector<2x128xf32>
    %224 = arith.addf %221, %223 : vector<2x128xf32>
    %225 = vector.extract_strided_slice %224 {offsets = [0, 0], sizes = [2, 32], strides = [1, 1]} : vector<2x128xf32> to vector<2x32xf32>
    %226 = arith.negf %225 : vector<2x32xf32>
    %227 = math.exp %226 : vector<2x32xf32>
    %cst_53 = arith.constant 1.000000e+00 : f32
    %228 = vector.broadcast %cst_53 : f32 to vector<2x32xf32>
    %229 = arith.addf %228, %227 : vector<2x32xf32>
    %230 = arith.divf %228, %229 : vector<2x32xf32>
    %231 = vector.extract_strided_slice %224 {offsets = [0, 32], sizes = [2, 32], strides = [1, 1]} : vector<2x128xf32> to vector<2x32xf32>
    %232 = arith.negf %231 : vector<2x32xf32>
    %233 = math.exp %232 : vector<2x32xf32>
    %cst_54 = arith.constant 1.000000e+00 : f32
    %234 = vector.broadcast %cst_54 : f32 to vector<2x32xf32>
    %235 = arith.addf %234, %233 : vector<2x32xf32>
    %236 = arith.divf %234, %235 : vector<2x32xf32>
    %237 = vector.extract_strided_slice %224 {offsets = [0, 64], sizes = [2, 32], strides = [1, 1]} : vector<2x128xf32> to vector<2x32xf32>
    %238 = math.tanh %237 : vector<2x32xf32>
    %239 = vector.extract_strided_slice %224 {offsets = [0, 96], sizes = [2, 32], strides = [1, 1]} : vector<2x128xf32> to vector<2x32xf32>
    %240 = arith.negf %239 : vector<2x32xf32>
    %241 = math.exp %240 : vector<2x32xf32>
    %cst_55 = arith.constant 1.000000e+00 : f32
    %242 = vector.broadcast %cst_55 : f32 to vector<2x32xf32>
    %243 = arith.addf %242, %241 : vector<2x32xf32>
    %244 = arith.divf %242, %243 : vector<2x32xf32>
    %245 = arith.mulf %236, %217 : vector<2x32xf32>
    %246 = arith.mulf %230, %238 : vector<2x32xf32>
    %247 = arith.addf %245, %246 : vector<2x32xf32>
    %248 = math.tanh %247 : vector<2x32xf32>
    %249 = arith.mulf %244, %248 : vector<2x32xf32>
    %c0_56 = arith.constant 0 : index
    %c0_57 = arith.constant 0 : index
    %250 = vector.load %arg5[%c0_56, %c0_57] : memref<32x32xf32, #tpu.memory_space<vmem>>, vector<32x32xf32>
    %cst_58 = arith.constant dense<0.000000e+00> : vector<2x32xf32>
    %251 = tpu.matmul %249, %250, %cst_58 {dimension_numbers = #tpu.dot_dimension_numbers<[1], [0], [0], [1], [0, 0, 1, 1], [], []>} : vector<2x32xf32>, vector<32x32xf32>, vector<2x32xf32> -> vector<2x32xf32>
    %c0_59 = arith.constant 0 : index
    %c0_60 = arith.constant 0 : index
    %252 = vector.load %arg6[%c0_59, %c0_60] : memref<1x32xf32, #tpu.memory_space<vmem>>, vector<1x32xf32>
    %253 = vector.broadcast %252 : vector<1x32xf32> to vector<2x32xf32>
    %254 = arith.addf %251, %253 : vector<2x32xf32>
    %255 = arith.mulf %254, %254 : vector<2x32xf32>
    %cst_61 = arith.constant dense<0.000000e+00> : vector<2xf32>
    %256 = vector.multi_reduction <add>, %255, %cst_61 [1] : vector<2x32xf32> to vector<2xf32>
    %257 = vector.shape_cast %256 : vector<2xf32> to vector<2x1xf32>
    %cst_62 = arith.constant 1.000000e-24 : f32
    %258 = vector.broadcast %cst_62 : f32 to vector<2x1xf32>
    %259 = arith.maximumf %257, %258 : vector<2x1xf32>
    %260 = math.rsqrt %259 : vector<2x1xf32>
    %261 = vector.broadcast %260 : vector<2x1xf32> to vector<2x32xf32>
    %262 = arith.mulf %254, %261 : vector<2x32xf32>
    %c0_63 = arith.constant 0 : index
    %c0_64 = arith.constant 0 : index
    %263 = vector.load %arg9[%c0_63, %c0_64] : memref<2x32xf32, #tpu.memory_space<vmem>>, vector<2x32xf32>
    tpu.vector_store %arg9[%c0_63, %c0_64], %262 {strides = array<i32>} : memref<2x32xf32, #tpu.memory_space<vmem>>, vector<2x32xf32>,
    %c0_65 = arith.constant 0 : index
    %c0_66 = arith.constant 0 : index
    %264 = vector.load %arg1[%c0_65, %c0_66] : memref<2x64xf32, #tpu.memory_space<vmem>>, vector<2x64xf32>
    %c0_67 = arith.constant 0 : index
    %c0_68 = arith.constant 0 : index
    %265 = vector.load %arg7[%c0_67, %c0_68] : memref<64x32xf32, #tpu.memory_space<vmem>>, vector<64x32xf32>
    %cst_69 = arith.constant dense<0.000000e+00> : vector<2x32xf32>
    %266 = tpu.matmul %264, %265, %cst_69 {dimension_numbers = #tpu.dot_dimension_numbers<[1], [0], [0], [1], [0, 0, 1, 1], [], []>} : vector<2x64xf32>, vector<64x32xf32>, vector<2x32xf32> -> vector<2x32xf32>
    %c0_70 = arith.constant 0 : index
    %c0_71 = arith.constant 0 : index
    %267 = vector.load %arg8[%c0_70, %c0_71] : memref<1x32xf32, #tpu.memory_space<vmem>>, vector<1x32xf32>
    %268 = vector.broadcast %267 : vector<1x32xf32> to vector<2x32xf32>
    %269 = arith.addf %266, %268 : vector<2x32xf32>
    %270 = arith.mulf %269, %269 : vector<2x32xf32>
    %cst_72 = arith.constant dense<0.000000e+00> : vector<2xf32>
    %271 = vector.multi_reduction <add>, %270, %cst_72 [1] : vector<2x32xf32> to vector<2xf32>
    %272 = vector.shape_cast %271 : vector<2xf32> to vector<2x1xf32>
    %cst_73 = arith.constant 1.000000e-24 : f32
    %273 = vector.broadcast %cst_73 : f32 to vector<2x1xf32>
    %274 = arith.maximumf %272, %273 : vector<2x1xf32>
    %275 = math.rsqrt %274 : vector<2x1xf32>
    %276 = vector.broadcast %275 : vector<2x1xf32> to vector<2x32xf32>
    %277 = arith.mulf %269, %276 : vector<2x32xf32>
    %c0_74 = arith.constant 0 : index
    %c0_75 = arith.constant 0 : index
    %278 = vector.load %arg10[%c0_74, %c0_75] : memref<2x32xf32, #tpu.memory_space<vmem>>, vector<2x32xf32>
    tpu.vector_store %arg10[%c0_74, %c0_75], %277 {strides = array<i32>} : memref<2x32xf32, #tpu.memory_space<vmem>>, vector<2x32xf32>,
    return
  }
}

</mosaic_0001>

<llo_original>
// kernel: model_forward.1
$region0: #{model_forward.1}
  #allocation0 [shape = 'u32[]', space=smem, size = 0x4, offset = 0x4, fixed_abs, tag = 'smem constant byte address 0x4 - core index']
  #allocation1 [shape = 'u32[72,128]{1,0:T(1,128)}', space=vmem, size = 0x9000, scoped, tag = 'internal scratch']
  %s0 = inlined_call_operand.hbm [shape: f32[2,8,32], index: 0, kind: input, shape index: {}]
  %s1 = inlined_call_operand.vmem [shape: f32[2,64], index: 1, kind: input, shape index: {}]
  %s2 = inlined_call_operand.vmem [shape: f32[32,128], index: 2, kind: input, shape index: {}]
  %s3 = inlined_call_operand.vmem [shape: f32[32,128], index: 3, kind: input, shape index: {}]
  %s4 = inlined_call_operand.vmem [shape: f32[1,128], index: 4, kind: input, shape index: {}]
  %s5 = inlined_call_operand.vmem [shape: f32[32,32], index: 5, kind: input, shape index: {}]
  %s6 = inlined_call_operand.hbm [shape: f32[1,32], index: 6, kind: input, shape index: {}]
  %s7 = inlined_call_operand.vmem [shape: f32[64,32], index: 7, kind: input, shape index: {}]
  %s8 = inlined_call_operand.hbm [shape: f32[1,32], index: 8, kind: input, shape index: {}]
  %s9 = inlined_call_operand.hbm [shape: f32[2,32], index: 9, kind: output, shape index: {0}]
  %s10 = inlined_call_operand.hbm [shape: f32[2,32], index: 10, kind: output, shape index: {1}]
  %11 = xla_tuple %s9, %s10
  %s12 = sld [smem:[#allocation0]]
  $region66: #{model_forward.1} parent=0
    _
  %s14 = ssub.s32 1, %s12
  %s15 = scalar_select 0, %s14, %s12
  $region1: #{model_forward.1} parent=0
    #allocation2 [shape = 'u8[8192]{0}', space=vmem, size = 0x2000, scoped, tag = 'input window, operand 0, single buffered']
    #allocation3 [shape = 's32[1]{0}', space=sflag, size = 0x4, scoped, tag = 'scoped memory for model_forward.1']
    #allocation4 [shape = 's32[1]{0}', space=sflag, size = 0x4, scoped, tag = 'scoped memory for model_forward.1']
    #allocation5 [shape = 'u8[512]{0}', space=vmem, size = 0x400, scoped, tag = 'input window, operand 6, single buffered']
    #allocation6 [shape = 's32[1]{0}', space=sflag, size = 0x4, scoped, tag = 'scoped memory for model_forward.1']
    #allocation7 [shape = 'u8[512]{0}', space=vmem, size = 0x400, scoped, tag = 'input window, operand 8, single buffered']
    #allocation8 [shape = 'u8[1024]{0}', space=vmem, size = 0x400, scoped, tag = 'output window, operand 0, single buffered']
    #allocation9 [shape = 'u8[1024]{0}', space=vmem, size = 0x400, scoped, tag = 'output window, operand 1, single buffered']
    #allocation10 [shape = 's32[1]{0}', space=sflag, size = 0x4, scoped, tag = 'scoped memory for model_forward.1']
    %16 = vsyncpa [#allocation3], 0
    %17 = vsyncpa [#allocation6], 0
    %18 = vsyncpa [#allocation4], 0
    %19 = vsyncpa [#allocation10], 0
    // Predicated region
    $region2: #{model_forward.1} parent=1 // pred_check
      _
    $region3: #{model_forward.1} parent=1 // pred_check_branch
      %21 = sbr.rel (0) target = $region5
    $region4: #{model_forward.1} parent=1 // pred_region
      %23 = vsyncadd [#allocation3], 0
      %s24 = sshll.u32 %s0, 4
      %s25 = int_to_ptr.hbm [resolvable:$true] %s24
      %s26 = sshll.u32 [#allocation2], 4
      %s27 = int_to_ptr.vmem [resolvable:$true] %s26
      %32 = dma.hbm_to_vmem [thread:$0]  %s25, 256, %s27, [#allocation3], 128, 128, 8
    $region5: #{model_forward.1} parent=1 // pred_fallthru
      _
    // Predicated region
    $region6: #{model_forward.1} parent=1 // pred_check
      _
    $region7: #{model_forward.1} parent=1 // pred_check_branch
      %34 = sbr.rel (0) target = $region9
    $region8: #{model_forward.1} parent=1 // pred_region
      _
    $region9: #{model_forward.1} parent=1 // pred_fallthru
      _
    // Predicated region
    $region10: #{model_forward.1} parent=1 // pred_check
      _
    $region11: #{model_forward.1} parent=1 // pred_check_branch
      %36 = sbr.rel (0) target = $region13
    $region12: #{model_forward.1} parent=1 // pred_region
      _
    $region13: #{model_forward.1} parent=1 // pred_fallthru
      _
    // Predicated region
    $region14: #{model_forward.1} parent=1 // pred_check
      _
    $region15: #{model_forward.1} parent=1 // pred_check_branch
      %38 = sbr.rel (0) target = $region17
    $region16: #{model_forward.1} parent=1 // pred_region
      _
    $region17: #{model_forward.1} parent=1 // pred_fallthru
      _
    // Predicated region
    $region18: #{model_forward.1} parent=1 // pred_check
      _
    $region19: #{model_forward.1} parent=1 // pred_check_branch
      %40 = sbr.rel (0) target = $region21
    $region20: #{model_forward.1} parent=1 // pred_region
      _
    $region21: #{model_forward.1} parent=1 // pred_fallthru
      _
    // Predicated region
    $region22: #{model_forward.1} parent=1 // pred_check
      _
    $region23: #{model_forward.1} parent=1 // pred_check_branch
      %42 = sbr.rel (0) target = $region25
    $region24: #{model_forward.1} parent=1 // pred_region
      _
    $region25: #{model_forward.1} parent=1 // pred_fallthru
      _
    // Predicated region
    $region26: #{model_forward.1} parent=1 // pred_check
      _
    $region27: #{model_forward.1} parent=1 // pred_check_branch
      %44 = sbr.rel (0) target = $region29
    $region28: #{model_forward.1} parent=1 // pred_region
      %46 = vsyncadd [#allocation6], 0
      %s48 = sshll.u32 %s6, 4
      %s49 = int_to_ptr.hbm [resolvable:$true] %s48
      %s50 = sshll.u32 [#allocation5], 4
      %s51 = int_to_ptr.vmem [resolvable:$true] %s50
      %53 = dma.hbm_to_vmem [thread:$0]  %s49, 16, %s51, [#allocation6]
    $region29: #{model_forward.1} parent=1 // pred_fallthru
      _
    // Predicated region
    $region30: #{model_forward.1} parent=1 // pred_check
      _
    $region31: #{model_forward.1} parent=1 // pred_check_branch
      %55 = sbr.rel (0) target = $region33
    $region32: #{model_forward.1} parent=1 // pred_region
      _
    $region33: #{model_forward.1} parent=1 // pred_fallthru
      _
    // Predicated region
    $region34: #{model_forward.1} parent=1 // pred_check
      _
    $region35: #{model_forward.1} parent=1 // pred_check_branch
      %57 = sbr.rel (0) target = $region37
    $region36: #{model_forward.1} parent=1 // pred_region
      %59 = vsyncadd [#allocation6], 0
      %s61 = sshll.u32 %s8, 4
      %s62 = int_to_ptr.hbm [resolvable:$true] %s61
      %s63 = sshll.u32 [#allocation7], 4
      %s64 = int_to_ptr.vmem [resolvable:$true] %s63
      %66 = dma.hbm_to_vmem [thread:$0]  %s62, 16, %s64, [#allocation6]
    $region37: #{model_forward.1} parent=1 // pred_fallthru
      _
    // Predicated region
    $region38: #{model_forward.1} parent=1 // pred_check
      _
    $region39: #{model_forward.1} parent=1 // pred_check_branch
      %68 = sbr.rel (0) target = $region41
    $region40: #{model_forward.1} parent=1 // pred_region
      %70 = dma.done [#allocation3], 256
    $region41: #{model_forward.1} parent=1 // pred_fallthru
      _
    // Predicated region
    $region42: #{model_forward.1} parent=1 // pred_check
      _
    $region43: #{model_forward.1} parent=1 // pred_check_branch
      %72 = sbr.rel (0) target = $region45
    $region44: #{model_forward.1} parent=1 // pred_region
      %74 = dma.done [#allocation6], 16
    $region45: #{model_forward.1} parent=1 // pred_fallthru
      _
    // Predicated region
    $region46: #{model_forward.1} parent=1 // pred_check
      _
    $region47: #{model_forward.1} parent=1 // pred_check_branch
      %76 = sbr.rel (0) target = $region49
    $region48: #{model_forward.1} parent=1 // pred_region
      %78 = dma.done [#allocation6], 16
    $region49: #{model_forward.1} parent=1 // pred_fallthru
      _
    %v79 = vld [vmem:[#allocation2] sm:$0xff]
    %v80 = vld [vmem:[#allocation2 + $0x8] sm:$0xff]
    %v81 = vld [vmem:[%s2] sm:$0xff]
    %v82 = vld [vmem:[%s2 + $0x8] sm:$0xff]
    %v83 = vld [vmem:[%s2 + $0x10] sm:$0xff]
    %v84 = vld [vmem:[%s2 + $0x18] sm:$0xff]
    %v85 = vld [vmem:[%s4] sm:$0x1]
    %v87 = vperm.slane %v85, 0
    %vm89 = vcmask 261120
    %v91 = vsel %vm89, %v79, 0
    %v94 = vsel %vm89, %v80, 0
    %96 = vmatpush.msra.mxu0 0.0
    %97 = vmatpush.msra.mxu0 0.0
    %98 = vmatpush.msra.mxu0 0.0
    %99 = vmatpush.msra.mxu0 0.0
    %100 = vmatpush.msra.mxu0 0.0
    %101 = vmatpush.msra.mxu0 0.0
    %102 = vmatpush.msra.mxu0 0.0
    %103 = vmatpush.msra.mxu0 0.0
    %104 = vmatpush.msra.mxu0 0.0
    %105 = vmatpush.msra.mxu0 0.0
    %106 = vmatpush.msra.mxu0 0.0
    %107 = vmatpush.msra.mxu0 0.0
    %108 = vmatpush.msra.mxu0 %v84
    %109 = vmatpush.msra.mxu0 %v83
    %110 = vmatpush.msra.mxu0 %v82
    %111 = vmatpush.msra.mxu0 %v81
    %112 = vmatmul.f32.gmra.mxu0 %v91
    %v113 = vpop.f32.mrf.mxu0
    %v114 = vadd.f32 %v87, %v113
    %115 = vmatmul.f32.gmra.mxu0 %v94
    %v116 = vpop.f32.mrf.mxu0
    %v117 = vadd.f32 %v87, %v116
    %118 = vdwg.mxu0
    %v119 = vld [vmem:[%s3] sm:$0xff]
    %v120 = vld [vmem:[%s3 + $0x8] sm:$0xff]
    %v121 = vld [vmem:[%s3 + $0x10] sm:$0xff]
    %v122 = vld [vmem:[%s3 + $0x18] sm:$0xff]
    %v124 = vsel %vm89, 0.0, 0
    %126 = vmatpush.msra.mxu0 0.0
    %127 = vmatpush.msra.mxu0 0.0
    %128 = vmatpush.msra.mxu0 0.0
    %129 = vmatpush.msra.mxu0 0.0
    %130 = vmatpush.msra.mxu0 0.0
    %131 = vmatpush.msra.mxu0 0.0
    %132 = vmatpush.msra.mxu0 0.0
    %133 = vmatpush.msra.mxu0 0.0
    %134 = vmatpush.msra.mxu0 0.0
    %135 = vmatpush.msra.mxu0 0.0
    %136 = vmatpush.msra.mxu0 0.0
    %137 = vmatpush.msra.mxu0 0.0
    %138 = vmatpush.msra.mxu0 %v122
    %139 = vmatpush.msra.mxu0 %v121
    %140 = vmatpush.msra.mxu0 %v120
    %141 = vmatpush.msra.mxu0 %v119
    %142 = vmatmul.f32.gmra.mxu0 %v124
    %v143 = vpop.f32.mrf.mxu0
    %v144 = vadd.f32 0.0, %v143
    %145 = vdwg.mxu0
    %v147 = vrot.slane %v144, 1
    %v150 = vadd.f32 %v114, %v144
    %v151 = vadd.f32 %v117, %v147
    %v152 = vxor.u32 %v150, 2147483648
    %v153 = vxor.u32 %v151, 2147483648
    %v154 = vmul.f32 %v152, 1.442695
    %v155 = vpow.pop %v154
    %v156 = vmul.f32 %v153, 1.442695
    %v157 = vpow.pop %v156
    %v158 = vadd.f32 %v155, 1.0
    %v159 = vadd.f32 %v157, 1.0
    %v160 = vrcp.pop %v158
    %v161 = vmul.f32 %v158, %v160
    %v162 = vsub.f32 1.0, %v161
    %v163 = vmul.f32 %v160, %v162
    %v164 = vadd.f32 %v160, %v163
    %vm165 = vweird.f32 %v158
    %vm166 = vweird.f32 %v160
    %vm167 = vmor %vm165, %vm166
    %v168 = vsel %vm167, %v160, %v164
    %v169 = vand.u32 2147483647, %v158
    %vm170 = vcmp.eq.f32.partialorder %v169, 8.507059e+37
    %v171 = vand.u32 %v158, 2147483648
    %v172 = vor.u32 1.1754944e-38, %v171
    %v173 = vsel %vm170, %v172, %v168
    %v174 = vmul.f32 1.0, %v173
    %v175 = vrcp.pop %v159
    %v176 = vmul.f32 %v159, %v175
    %v177 = vsub.f32 1.0, %v176
    %v178 = vmul.f32 %v175, %v177
    %v179 = vadd.f32 %v175, %v178
    %vm180 = vweird.f32 %v159
    %vm181 = vweird.f32 %v175
    %vm182 = vmor %vm180, %vm181
    %v183 = vsel %vm182, %v175, %v179
    %v184 = vand.u32 2147483647, %v159
    %vm185 = vcmp.eq.f32.partialorder %v184, 8.507059e+37
    %v186 = vand.u32 %v159, 2147483648
    %v187 = vor.u32 1.1754944e-38, %v186
    %v188 = vsel %vm185, %v187, %v183
    %v189 = vmul.f32 1.0, %v188
    %v190 = vtanh.pop %v150
    %v191 = vtanh.pop %v151
    %v192 = vmul.f32 %v174, 0.0
    %v193 = vmul.f32 %v189, 0.0
    %196 = vrot.lane.b32.xlu0 %v190, 64
    %v197 = vpop.permute.xlu0 %196
    %198 = vrot.lane.b32.xlu0 %v191, 64
    %v199 = vpop.permute.xlu0 %198
    %v202 = vmul.f32 %v174, %v197
    %v203 = vmul.f32 %v189, %v199
    %206 = vrot.lane.b32.xlu0 %v202, 32
    %v207 = vpop.permute.xlu0 %206
    %208 = vrot.lane.b32.xlu0 %v203, 32
    %v209 = vpop.permute.xlu0 %208
    %v212 = vadd.f32 %v192, %v207
    %v213 = vadd.f32 %v193, %v209
    %v214 = vtanh.pop %v212
    %v215 = vtanh.pop %v213
    %218 = vrot.lane.b32.xlu0 %v214, 64
    %v219 = vpop.permute.xlu0 %218
    %220 = vrot.lane.b32.xlu0 %v215, 64
    %v221 = vpop.permute.xlu0 %220
    %v224 = vmul.f32 %v174, %v219
    %v225 = vmul.f32 %v189, %v221
    %v228 = vrot.slane %v225, 7
    %vm229 = vcmask 1041409
    %v230 = vsel %vm229, %v228, %v224
    %231 = vrot.lane.b32.xlu0 %v230, 32
    %v232 = vpop.permute.xlu0 %231
    %v233 = vsel %vm89, %v232, 0
    %235 = vmatpush.msra.mxu0 0.0
    %236 = vmatpush.msra.mxu0 0.0
    %237 = vmatpush.msra.mxu0 0.0
    %238 = vmatpush.msra.mxu0 0.0
    %239 = vmatpush.msra.mxu0 0.0
    %240 = vmatpush.msra.mxu0 0.0
    %241 = vmatpush.msra.mxu0 0.0
    %242 = vmatpush.msra.mxu0 0.0
    %243 = vmatpush.msra.mxu0 0.0
    %244 = vmatpush.msra.mxu0 0.0
    %245 = vmatpush.msra.mxu0 0.0
    %246 = vmatpush.msra.mxu0 0.0
    %247 = vmatpush.msra.mxu0 %v122
    %248 = vmatpush.msra.mxu0 %v121
    %249 = vmatpush.msra.mxu0 %v120
    %250 = vmatpush.msra.mxu0 %v119
    %251 = vmatmul.f32.gmra.mxu0 %v233
    %v252 = vpop.f32.mrf.mxu0
    %v253 = vadd.f32 0.0, %v252
    %254 = vdwg.mxu0
    %v256 = vrot.slane %v253, 7
    %v259 = vadd.f32 %v114, %v256
    %v260 = vadd.f32 %v117, %v253
    %v261 = vxor.u32 %v259, 2147483648
    %v262 = vxor.u32 %v260, 2147483648
    %v263 = vmul.f32 %v261, 1.442695
    %v264 = vpow.pop %v263
    %v265 = vmul.f32 %v262, 1.442695
    %v266 = vpow.pop %v265
    %v267 = vadd.f32 %v264, 1.0
    %v268 = vadd.f32 %v266, 1.0
    %v269 = vrcp.pop %v267
    %v270 = vmul.f32 %v267, %v269
    %v271 = vsub.f32 1.0, %v270
    %v272 = vmul.f32 %v269, %v271
    %v273 = vadd.f32 %v269, %v272
    %vm274 = vweird.f32 %v267
    %vm275 = vweird.f32 %v269
    %vm276 = vmor %vm274, %vm275
    %v277 = vsel %vm276, %v269, %v273
    %v278 = vand.u32 2147483647, %v267
    %vm279 = vcmp.eq.f32.partialorder %v278, 8.507059e+37
    %v280 = vand.u32 %v267, 2147483648
    %v281 = vor.u32 1.1754944e-38, %v280
    %v282 = vsel %vm279, %v281, %v277
    %v283 = vmul.f32 1.0, %v282
    %v284 = vrcp.pop %v268
    %v285 = vmul.f32 %v268, %v284
    %v286 = vsub.f32 1.0, %v285
    %v287 = vmul.f32 %v284, %v286
    %v288 = vadd.f32 %v284, %v287
    %vm289 = vweird.f32 %v268
    %vm290 = vweird.f32 %v284
    %vm291 = vmor %vm289, %vm290
    %v292 = vsel %vm291, %v284, %v288
    %v293 = vand.u32 2147483647, %v268
    %vm294 = vcmp.eq.f32.partialorder %v293, 8.507059e+37
    %v295 = vand.u32 %v268, 2147483648
    %v296 = vor.u32 1.1754944e-38, %v295
    %v297 = vsel %vm294, %v296, %v292
    %v298 = vmul.f32 1.0, %v297
    %v299 = vtanh.pop %v259
    %v300 = vtanh.pop %v260
    %v303 = vrot.slane %v212, 7
    %v304 = vrot.slane %v213, 7
    %v307 = vmul.f32 %v283, %v303
    %v308 = vmul.f32 %v298, %v304
    %311 = vrot.lane.b32.xlu0 %v299, 64
    %v312 = vpop.permute.xlu0 %311
    %313 = vrot.lane.b32.xlu0 %v300, 64
    %v314 = vpop.permute.xlu0 %313
    %v317 = vmul.f32 %v283, %v312
    %v318 = vmul.f32 %v298, %v314
    %321 = vrot.lane.b32.xlu0 %v317, 32
    %v322 = vpop.permute.xlu0 %321
    %323 = vrot.lane.b32.xlu0 %v318, 32
    %v324 = vpop.permute.xlu0 %323
    %v327 = vadd.f32 %v307, %v322
    %v328 = vadd.f32 %v308, %v324
    %v329 = vtanh.pop %v327
    %v330 = vtanh.pop %v328
    %333 = vrot.lane.b32.xlu0 %v329, 64
    %v334 = vpop.permute.xlu0 %333
    %335 = vrot.lane.b32.xlu0 %v330, 64
    %v336 = vpop.permute.xlu0 %335
    %v339 = vmul.f32 %v283, %v334
    %v340 = vmul.f32 %v298, %v336
    %v343 = vrot.slane %v339, 1
    %v344 = vsel %vm229, %v340, %v343
    %345 = vrot.lane.b32.xlu0 %v344, 32
    %v346 = vpop.permute.xlu0 %345
    %v347 = vsel %vm89, %v346, 0
    %349 = vmatpush.msra.mxu0 0.0
    %350 = vmatpush.msra.mxu0 0.0
    %351 = vmatpush.msra.mxu0 0.0
    %352 = vmatpush.msra.mxu0 0.0
    %353 = vmatpush.msra.mxu0 0.0
    %354 = vmatpush.msra.mxu0 0.0
    %355 = vmatpush.msra.mxu0 0.0
    %356 = vmatpush.msra.mxu0 0.0
    %357 = vmatpush.msra.mxu0 0.0
    %358 = vmatpush.msra.mxu0 0.0
    %359 = vmatpush.msra.mxu0 0.0
    %360 = vmatpush.msra.mxu0 0.0
    %361 = vmatpush.msra.mxu0 %v122
    %362 = vmatpush.msra.mxu0 %v121
    %363 = vmatpush.msra.mxu0 %v120
    %364 = vmatpush.msra.mxu0 %v119
    %365 = vmatmul.f32.gmra.mxu0 %v347
    %v366 = vpop.f32.mrf.mxu0
    %v367 = vadd.f32 0.0, %v366
    %368 = vdwg.mxu0
    %v370 = vrot.slane %v367, 6
    %v371 = vrot.slane %v367, 7
    %v374 = vadd.f32 %v114, %v370
    %v375 = vadd.f32 %v117, %v371
    %v376 = vxor.u32 %v374, 2147483648
    %v377 = vxor.u32 %v375, 2147483648
    %v378 = vmul.f32 %v376, 1.442695
    %v379 = vpow.pop %v378
    %v380 = vmul.f32 %v377, 1.442695
    %v381 = vpow.pop %v380
    %v382 = vadd.f32 %v379, 1.0
    %v383 = vadd.f32 %v381, 1.0
    %v384 = vrcp.pop %v382
    %v385 = vmul.f32 %v382, %v384
    %v386 = vsub.f32 1.0, %v385
    %v387 = vmul.f32 %v384, %v386
    %v388 = vadd.f32 %v384, %v387
    %vm389 = vweird.f32 %v382
    %vm390 = vweird.f32 %v384
    %vm391 = vmor %vm389, %vm390
    %v392 = vsel %vm391, %v384, %v388
    %v393 = vand.u32 2147483647, %v382
    %vm394 = vcmp.eq.f32.partialorder %v393, 8.507059e+37
    %v395 = vand.u32 %v382, 2147483648
    %v396 = vor.u32 1.1754944e-38, %v395
    %v397 = vsel %vm394, %v396, %v392
    %v398 = vmul.f32 1.0, %v397
    %v399 = vrcp.pop %v383
    %v400 = vmul.f32 %v383, %v399
    %v401 = vsub.f32 1.0, %v400
    %v402 = vmul.f32 %v399, %v401
    %v403 = vadd.f32 %v399, %v402
    %vm404 = vweird.f32 %v383
    %vm405 = vweird.f32 %v399
    %vm406 = vmor %vm404, %vm405
    %v407 = vsel %vm406, %v399, %v403
    %v408 = vand.u32 2147483647, %v383
    %vm409 = vcmp.eq.f32.partialorder %v408, 8.507059e+37
    %v410 = vand.u32 %v383, 2147483648
    %v411 = vor.u32 1.1754944e-38, %v410
    %v412 = vsel %vm409, %v411, %v407
    %v413 = vmul.f32 1.0, %v412
    %v414 = vtanh.pop %v374
    %v415 = vtanh.pop %v375
    %v418 = vrot.slane %v327, 7
    %v419 = vrot.slane %v328, 7
    %v422 = vmul.f32 %v398, %v418
    %v423 = vmul.f32 %v413, %v419
    %426 = vrot.lane.b32.xlu0 %v414, 64
    %v427 = vpop.permute.xlu0 %426
    %428 = vrot.lane.b32.xlu0 %v415, 64
    %v429 = vpop.permute.xlu0 %428
    %v432 = vmul.f32 %v398, %v427
    %v433 = vmul.f32 %v413, %v429
    %436 = vrot.lane.b32.xlu0 %v432, 32
    %v437 = vpop.permute.xlu0 %436
    %438 = vrot.lane.b32.xlu0 %v433, 32
    %v439 = vpop.permute.xlu0 %438
    %v442 = vadd.f32 %v422, %v437
    %v443 = vadd.f32 %v423, %v439
    %v444 = vtanh.pop %v442
    %v445 = vtanh.pop %v443
    %448 = vrot.lane.b32.xlu0 %v444, 64
    %v449 = vpop.permute.xlu0 %448
    %450 = vrot.lane.b32.xlu0 %v445, 64
    %v451 = vpop.permute.xlu0 %450
    %v454 = vmul.f32 %v398, %v449
    %v455 = vmul.f32 %v413, %v451
    %v458 = vrot.slane %v454, 2
    %v459 = vrot.slane %v455, 1
    %v460 = vsel %vm229, %v459, %v458
    %461 = vrot.lane.b32.xlu0 %v460, 32
    %v462 = vpop.permute.xlu0 %461
    %v463 = vsel %vm89, %v462, 0
    %465 = vmatpush.msra.mxu0 0.0
    %466 = vmatpush.msra.mxu0 0.0
    %467 = vmatpush.msra.mxu0 0.0
    %468 = vmatpush.msra.mxu0 0.0
    %469 = vmatpush.msra.mxu0 0.0
    %470 = vmatpush.msra.mxu0 0.0
    %471 = vmatpush.msra.mxu0 0.0
    %472 = vmatpush.msra.mxu0 0.0
    %473 = vmatpush.msra.mxu0 0.0
    %474 = vmatpush.msra.mxu0 0.0
    %475 = vmatpush.msra.mxu0 0.0
    %476 = vmatpush.msra.mxu0 0.0
    %477 = vmatpush.msra.mxu0 %v122
    %478 = vmatpush.msra.mxu0 %v121
    %479 = vmatpush.msra.mxu0 %v120
    %480 = vmatpush.msra.mxu0 %v119
    %481 = vmatmul.f32.gmra.mxu0 %v463
    %v482 = vpop.f32.mrf.mxu0
    %v483 = vadd.f32 0.0, %v482
    %484 = vdwg.mxu0
    %v486 = vrot.slane %v483, 5
    %v487 = vrot.slane %v483, 6
    %v490 = vadd.f32 %v114, %v486
    %v491 = vadd.f32 %v117, %v487
    %v492 = vxor.u32 %v490, 2147483648
    %v493 = vxor.u32 %v491, 2147483648
    %v494 = vmul.f32 %v492, 1.442695
    %v495 = vpow.pop %v494
    %v496 = vmul.f32 %v493, 1.442695
    %v497 = vpow.pop %v496
    %v498 = vadd.f32 %v495, 1.0
    %v499 = vadd.f32 %v497, 1.0
    %v500 = vrcp.pop %v498
    %v501 = vmul.f32 %v498, %v500
    %v502 = vsub.f32 1.0, %v501
    %v503 = vmul.f32 %v500, %v502
    %v504 = vadd.f32 %v500, %v503
    %vm505 = vweird.f32 %v498
    %vm506 = vweird.f32 %v500
    %vm507 = vmor %vm505, %vm506
    %v508 = vsel %vm507, %v500, %v504
    %v509 = vand.u32 2147483647, %v498
    %vm510 = vcmp.eq.f32.partialorder %v509, 8.507059e+37
    %v511 = vand.u32 %v498, 2147483648
    %v512 = vor.u32 1.1754944e-38, %v511
    %v513 = vsel %vm510, %v512, %v508
    %v514 = vmul.f32 1.0, %v513
    %v515 = vrcp.pop %v499
    %v516 = vmul.f32 %v499, %v515
    %v517 = vsub.f32 1.0, %v516
    %v518 = vmul.f32 %v515, %v517
    %v519 = vadd.f32 %v515, %v518
    %vm520 = vweird.f32 %v499
    %vm521 = vweird.f32 %v515
    %vm522 = vmor %vm520, %vm521
    %v523 = vsel %vm522, %v515, %v519
    %v524 = vand.u32 2147483647, %v499
    %vm525 = vcmp.eq.f32.partialorder %v524, 8.507059e+37
    %v526 = vand.u32 %v499, 2147483648
    %v527 = vor.u32 1.1754944e-38, %v526
    %v528 = vsel %vm525, %v527, %v523
    %v529 = vmul.f32 1.0, %v528
    %v530 = vtanh.pop %v490
    %v531 = vtanh.pop %v491
    %v534 = vrot.slane %v442, 7
    %v535 = vrot.slane %v443, 7
    %v538 = vmul.f32 %v514, %v534
    %v539 = vmul.f32 %v529, %v535
    %542 = vrot.lane.b32.xlu0 %v530, 64
    %v543 = vpop.permute.xlu0 %542
    %544 = vrot.lane.b32.xlu0 %v531, 64
    %v545 = vpop.permute.xlu0 %544
    %v548 = vmul.f32 %v514, %v543
    %v549 = vmul.f32 %v529, %v545
    %552 = vrot.lane.b32.xlu0 %v548, 32
    %v553 = vpop.permute.xlu0 %552
    %554 = vrot.lane.b32.xlu0 %v549, 32
    %v555 = vpop.permute.xlu0 %554
    %v558 = vadd.f32 %v538, %v553
    %v559 = vadd.f32 %v539, %v555
    %v560 = vtanh.pop %v558
    %v561 = vtanh.pop %v559
    %564 = vrot.lane.b32.xlu0 %v560, 64
    %v565 = vpop.permute.xlu0 %564
    %566 = vrot.lane.b32.xlu0 %v561, 64
    %v567 = vpop.permute.xlu0 %566
    %v570 = vmul.f32 %v514, %v565
    %v571 = vmul.f32 %v529, %v567
    %v574 = vrot.slane %v570, 3
    %v575 = vrot.slane %v571, 2
    %v576 = vsel %vm229, %v575, %v574
    %577 = vrot.lane.b32.xlu0 %v576, 32
    %v578 = vpop.permute.xlu0 %577
    %v579 = vsel %vm89, %v578, 0
    %581 = vmatpush.msra.mxu0 0.0
    %582 = vmatpush.msra.mxu0 0.0
    %583 = vmatpush.msra.mxu0 0.0
    %584 = vmatpush.msra.mxu0 0.0
    %585 = vmatpush.msra.mxu0 0.0
    %586 = vmatpush.msra.mxu0 0.0
    %587 = vmatpush.msra.mxu0 0.0
    %588 = vmatpush.msra.mxu0 0.0
    %589 = vmatpush.msra.mxu0 0.0
    %590 = vmatpush.msra.mxu0 0.0
    %591 = vmatpush.msra.mxu0 0.0
    %592 = vmatpush.msra.mxu0 0.0
    %593 = vmatpush.msra.mxu0 %v122
    %594 = vmatpush.msra.mxu0 %v121
    %595 = vmatpush.msra.mxu0 %v120
    %596 = vmatpush.msra.mxu0 %v119
    %597 = vmatmul.f32.gmra.mxu0 %v579
    %v598 = vpop.f32.mrf.mxu0
    %v599 = vadd.f32 0.0, %v598
    %600 = vdwg.mxu0
    %v602 = vrot.slane %v599, 4
    %v603 = vrot.slane %v599, 5
    %v606 = vadd.f32 %v114, %v602
    %v607 = vadd.f32 %v117, %v603
    %v608 = vxor.u32 %v606, 2147483648
    %v609 = vxor.u32 %v607, 2147483648
    %v610 = vmul.f32 %v608, 1.442695
    %v611 = vpow.pop %v610
    %v612 = vmul.f32 %v609, 1.442695
    %v613 = vpow.pop %v612
    %v614 = vadd.f32 %v611, 1.0
    %v615 = vadd.f32 %v613, 1.0
    %v616 = vrcp.pop %v614
    %v617 = vmul.f32 %v614, %v616
    %v618 = vsub.f32 1.0, %v617
    %v619 = vmul.f32 %v616, %v618
    %v620 = vadd.f32 %v616, %v619
    %vm621 = vweird.f32 %v614
    %vm622 = vweird.f32 %v616
    %vm623 = vmor %vm621, %vm622
    %v624 = vsel %vm623, %v616, %v620
    %v625 = vand.u32 2147483647, %v614
    %vm626 = vcmp.eq.f32.partialorder %v625, 8.507059e+37
    %v627 = vand.u32 %v614, 2147483648
    %v628 = vor.u32 1.1754944e-38, %v627
    %v629 = vsel %vm626, %v628, %v624
    %v630 = vmul.f32 1.0, %v629
    %v631 = vrcp.pop %v615
    %v632 = vmul.f32 %v615, %v631
    %v633 = vsub.f32 1.0, %v632
    %v634 = vmul.f32 %v631, %v633
    %v635 = vadd.f32 %v631, %v634
    %vm636 = vweird.f32 %v615
    %vm637 = vweird.f32 %v631
    %vm638 = vmor %vm636, %vm637
    %v639 = vsel %vm638, %v631, %v635
    %v640 = vand.u32 2147483647, %v615
    %vm641 = vcmp.eq.f32.partialorder %v640, 8.507059e+37
    %v642 = vand.u32 %v615, 2147483648
    %v643 = vor.u32 1.1754944e-38, %v642
    %v644 = vsel %vm641, %v643, %v639
    %v645 = vmul.f32 1.0, %v644
    %v646 = vtanh.pop %v606
    %v647 = vtanh.pop %v607
    %v650 = vrot.slane %v558, 7
    %v651 = vrot.slane %v559, 7
    %v654 = vmul.f32 %v630, %v650
    %v655 = vmul.f32 %v645, %v651
    %658 = vrot.lane.b32.xlu0 %v646, 64
    %v659 = vpop.permute.xlu0 %658
    %660 = vrot.lane.b32.xlu0 %v647, 64
    %v661 = vpop.permute.xlu0 %660
    %v664 = vmul.f32 %v630, %v659
    %v665 = vmul.f32 %v645, %v661
    %668 = vrot.lane.b32.xlu0 %v664, 32
    %v669 = vpop.permute.xlu0 %668
    %670 = vrot.lane.b32.xlu0 %v665, 32
    %v671 = vpop.permute.xlu0 %670
    %v674 = vadd.f32 %v654, %v669
    %v675 = vadd.f32 %v655, %v671
    %v676 = vtanh.pop %v674
    %v677 = vtanh.pop %v675
    %680 = vrot.lane.b32.xlu0 %v676, 64
    %v681 = vpop.permute.xlu0 %680
    %682 = vrot.lane.b32.xlu0 %v677, 64
    %v683 = vpop.permute.xlu0 %682
    %v686 = vmul.f32 %v630, %v681
    %v687 = vmul.f32 %v645, %v683
    %v690 = vrot.slane %v686, 4
    %v691 = vrot.slane %v687, 3
    %v692 = vsel %vm229, %v691, %v690
    %693 = vrot.lane.b32.xlu0 %v692, 32
    %v694 = vpop.permute.xlu0 %693
    %v695 = vsel %vm89, %v694, 0
    %697 = vmatpush.msra.mxu0 0.0
    %698 = vmatpush.msra.mxu0 0.0
    %699 = vmatpush.msra.mxu0 0.0
    %700 = vmatpush.msra.mxu0 0.0
    %701 = vmatpush.msra.mxu0 0.0
    %702 = vmatpush.msra.mxu0 0.0
    %703 = vmatpush.msra.mxu0 0.0
    %704 = vmatpush.msra.mxu0 0.0
    %705 = vmatpush.msra.mxu0 0.0
    %706 = vmatpush.msra.mxu0 0.0
    %707 = vmatpush.msra.mxu0 0.0
    %708 = vmatpush.msra.mxu0 0.0
    %709 = vmatpush.msra.mxu0 %v122
    %710 = vmatpush.msra.mxu0 %v121
    %711 = vmatpush.msra.mxu0 %v120
    %712 = vmatpush.msra.mxu0 %v119
    %713 = vmatmul.f32.gmra.mxu0 %v695
    %v714 = vpop.f32.mrf.mxu0
    %v715 = vadd.f32 0.0, %v714
    %716 = vdwg.mxu0
    %v718 = vrot.slane %v715, 3
    %v719 = vrot.slane %v715, 4
    %v722 = vadd.f32 %v114, %v718
    %v723 = vadd.f32 %v117, %v719
    %v724 = vxor.u32 %v722, 2147483648
    %v725 = vxor.u32 %v723, 2147483648
    %v726 = vmul.f32 %v724, 1.442695
    %v727 = vpow.pop %v726
    %v728 = vmul.f32 %v725, 1.442695
    %v729 = vpow.pop %v728
    %v730 = vadd.f32 %v727, 1.0
    %v731 = vadd.f32 %v729, 1.0
    %v732 = vrcp.pop %v730
    %v733 = vmul.f32 %v730, %v732
    %v734 = vsub.f32 1.0, %v733
    %v735 = vmul.f32 %v732, %v734
    %v736 = vadd.f32 %v732, %v735
    %vm737 = vweird.f32 %v730
    %vm738 = vweird.f32 %v732
    %vm739 = vmor %vm737, %vm738
    %v740 = vsel %vm739, %v732, %v736
    %v741 = vand.u32 2147483647, %v730
    %vm742 = vcmp.eq.f32.partialorder %v741, 8.507059e+37
    %v743 = vand.u32 %v730, 2147483648
    %v744 = vor.u32 1.1754944e-38, %v743
    %v745 = vsel %vm742, %v744, %v740
    %v746 = vmul.f32 1.0, %v745
    %v747 = vrcp.pop %v731
    %v748 = vmul.f32 %v731, %v747
    %v749 = vsub.f32 1.0, %v748
    %v750 = vmul.f32 %v747, %v749
    %v751 = vadd.f32 %v747, %v750
    %vm752 = vweird.f32 %v731
    %vm753 = vweird.f32 %v747
    %vm754 = vmor %vm752, %vm753
    %v755 = vsel %vm754, %v747, %v751
    %v756 = vand.u32 2147483647, %v731
    %vm757 = vcmp.eq.f32.partialorder %v756, 8.507059e+37
    %v758 = vand.u32 %v731, 2147483648
    %v759 = vor.u32 1.1754944e-38, %v758
    %v760 = vsel %vm757, %v759, %v755
    %v761 = vmul.f32 1.0, %v760
    %v762 = vtanh.pop %v722
    %v763 = vtanh.pop %v723
    %v766 = vrot.slane %v674, 7
    %v767 = vrot.slane %v675, 7
    %v770 = vmul.f32 %v746, %v766
    %v771 = vmul.f32 %v761, %v767
    %774 = vrot.lane.b32.xlu0 %v762, 64
    %v775 = vpop.permute.xlu0 %774
    %776 = vrot.lane.b32.xlu0 %v763, 64
    %v777 = vpop.permute.xlu0 %776
    %v780 = vmul.f32 %v746, %v775
    %v781 = vmul.f32 %v761, %v777
    %784 = vrot.lane.b32.xlu0 %v780, 32
    %v785 = vpop.permute.xlu0 %784
    %786 = vrot.lane.b32.xlu0 %v781, 32
    %v787 = vpop.permute.xlu0 %786
    %v790 = vadd.f32 %v770, %v785
    %v791 = vadd.f32 %v771, %v787
    %v792 = vtanh.pop %v790
    %v793 = vtanh.pop %v791
    %796 = vrot.lane.b32.xlu0 %v792, 64
    %v797 = vpop.permute.xlu0 %796
    %798 = vrot.lane.b32.xlu0 %v793, 64
    %v799 = vpop.permute.xlu0 %798
    %v802 = vmul.f32 %v746, %v797
    %v803 = vmul.f32 %v761, %v799
    %v806 = vrot.slane %v802, 5
    %v807 = vrot.slane %v803, 4
    %v808 = vsel %vm229, %v807, %v806
    %809 = vrot.lane.b32.xlu0 %v808, 32
    %v810 = vpop.permute.xlu0 %809
    %v811 = vsel %vm89, %v810, 0
    %813 = vmatpush.msra.mxu0 0.0
    %814 = vmatpush.msra.mxu0 0.0
    %815 = vmatpush.msra.mxu0 0.0
    %816 = vmatpush.msra.mxu0 0.0
    %817 = vmatpush.msra.mxu0 0.0
    %818 = vmatpush.msra.mxu0 0.0
    %819 = vmatpush.msra.mxu0 0.0
    %820 = vmatpush.msra.mxu0 0.0
    %821 = vmatpush.msra.mxu0 0.0
    %822 = vmatpush.msra.mxu0 0.0
    %823 = vmatpush.msra.mxu0 0.0
    %824 = vmatpush.msra.mxu0 0.0
    %825 = vmatpush.msra.mxu0 %v122
    %826 = vmatpush.msra.mxu0 %v121
    %827 = vmatpush.msra.mxu0 %v120
    %828 = vmatpush.msra.mxu0 %v119
    %829 = vmatmul.f32.gmra.mxu0 %v811
    %v830 = vpop.f32.mrf.mxu0
    %v831 = vadd.f32 0.0, %v830
    %832 = vdwg.mxu0
    %v834 = vrot.slane %v831, 2
    %v835 = vrot.slane %v831, 3
    %v838 = vadd.f32 %v114, %v834
    %v839 = vadd.f32 %v117, %v835
    %v840 = vxor.u32 %v838, 2147483648
    %v841 = vxor.u32 %v839, 2147483648
    %v842 = vmul.f32 %v840, 1.442695
    %v843 = vpow.pop %v842
    %v844 = vmul.f32 %v841, 1.442695
    %v845 = vpow.pop %v844
    %v846 = vadd.f32 %v843, 1.0
    %v847 = vadd.f32 %v845, 1.0
    %v848 = vrcp.pop %v846
    %v849 = vmul.f32 %v846, %v848
    %v850 = vsub.f32 1.0, %v849
    %v851 = vmul.f32 %v848, %v850
    %v852 = vadd.f32 %v848, %v851
    %vm853 = vweird.f32 %v846
    %vm854 = vweird.f32 %v848
    %vm855 = vmor %vm853, %vm854
    %v856 = vsel %vm855, %v848, %v852
    %v857 = vand.u32 2147483647, %v846
    %vm858 = vcmp.eq.f32.partialorder %v857, 8.507059e+37
    %v859 = vand.u32 %v846, 2147483648
    %v860 = vor.u32 1.1754944e-38, %v859
    %v861 = vsel %vm858, %v860, %v856
    %v862 = vmul.f32 1.0, %v861
    %v863 = vrcp.pop %v847
    %v864 = vmul.f32 %v847, %v863
    %v865 = vsub.f32 1.0, %v864
    %v866 = vmul.f32 %v863, %v865
    %v867 = vadd.f32 %v863, %v866
    %vm868 = vweird.f32 %v847
    %vm869 = vweird.f32 %v863
    %vm870 = vmor %vm868, %vm869
    %v871 = vsel %vm870, %v863, %v867
    %v872 = vand.u32 2147483647, %v847
    %vm873 = vcmp.eq.f32.partialorder %v872, 8.507059e+37
    %v874 = vand.u32 %v847, 2147483648
    %v875 = vor.u32 1.1754944e-38, %v874
    %v876 = vsel %vm873, %v875, %v871
    %v877 = vmul.f32 1.0, %v876
    %v878 = vtanh.pop %v838
    %v879 = vtanh.pop %v839
    %v882 = vrot.slane %v790, 7
    %v883 = vrot.slane %v791, 7
    %v886 = vmul.f32 %v862, %v882
    %v887 = vmul.f32 %v877, %v883
    %890 = vrot.lane.b32.xlu0 %v878, 64
    %v891 = vpop.permute.xlu0 %890
    %892 = vrot.lane.b32.xlu0 %v879, 64
    %v893 = vpop.permute.xlu0 %892
    %v896 = vmul.f32 %v862, %v891
    %v897 = vmul.f32 %v877, %v893
    %900 = vrot.lane.b32.xlu0 %v896, 32
    %v901 = vpop.permute.xlu0 %900
    %902 = vrot.lane.b32.xlu0 %v897, 32
    %v903 = vpop.permute.xlu0 %902
    %v906 = vadd.f32 %v886, %v901
    %v907 = vadd.f32 %v887, %v903
    %v908 = vtanh.pop %v906
    %v909 = vtanh.pop %v907
    %912 = vrot.lane.b32.xlu0 %v908, 64
    %v913 = vpop.permute.xlu0 %912
    %914 = vrot.lane.b32.xlu0 %v909, 64
    %v915 = vpop.permute.xlu0 %914
    %v918 = vmul.f32 %v862, %v913
    %v919 = vmul.f32 %v877, %v915
    %v922 = vrot.slane %v918, 6
    %v923 = vrot.slane %v919, 5
    %v924 = vsel %vm229, %v923, %v922
    %925 = vrot.lane.b32.xlu0 %v924, 32
    %v926 = vpop.permute.xlu0 %925
    %v927 = vsel %vm89, %v926, 0
    %929 = vmatpush.msra.mxu0 0.0
    %930 = vmatpush.msra.mxu0 0.0
    %931 = vmatpush.msra.mxu0 0.0
    %932 = vmatpush.msra.mxu0 0.0
    %933 = vmatpush.msra.mxu0 0.0
    %934 = vmatpush.msra.mxu0 0.0
    %935 = vmatpush.msra.mxu0 0.0
    %936 = vmatpush.msra.mxu0 0.0
    %937 = vmatpush.msra.mxu0 0.0
    %938 = vmatpush.msra.mxu0 0.0
    %939 = vmatpush.msra.mxu0 0.0
    %940 = vmatpush.msra.mxu0 0.0
    %941 = vmatpush.msra.mxu0 %v122
    %942 = vmatpush.msra.mxu0 %v121
    %943 = vmatpush.msra.mxu0 %v120
    %944 = vmatpush.msra.mxu0 %v119
    %945 = vmatmul.f32.gmra.mxu0 %v927
    %v946 = vpop.f32.mrf.mxu0
    %v947 = vadd.f32 0.0, %v946
    %948 = vdwg.mxu0
    %v950 = vrot.slane %v947, 1
    %v951 = vrot.slane %v947, 2
    %v954 = vadd.f32 %v114, %v950
    %v955 = vadd.f32 %v117, %v951
    %v956 = vxor.u32 %v954, 2147483648
    %v957 = vxor.u32 %v955, 2147483648
    %v958 = vmul.f32 %v956, 1.442695
    %v959 = vpow.pop %v958
    %v960 = vmul.f32 %v957, 1.442695
    %v961 = vpow.pop %v960
    %v962 = vadd.f32 %v959, 1.0
    %v963 = vadd.f32 %v961, 1.0
    %v964 = vrcp.pop %v962
    %v965 = vmul.f32 %v962, %v964
    %v966 = vsub.f32 1.0, %v965
    %v967 = vmul.f32 %v964, %v966
    %v968 = vadd.f32 %v964, %v967
    %vm969 = vweird.f32 %v962
    %vm970 = vweird.f32 %v964
    %vm971 = vmor %vm969, %vm970
    %v972 = vsel %vm971, %v964, %v968
    %v973 = vand.u32 2147483647, %v962
    %vm974 = vcmp.eq.f32.partialorder %v973, 8.507059e+37
    %v975 = vand.u32 %v962, 2147483648
    %v976 = vor.u32 1.1754944e-38, %v975
    %v977 = vsel %vm974, %v976, %v972
    %v978 = vmul.f32 1.0, %v977
    %v979 = vrcp.pop %v963
    %v980 = vmul.f32 %v963, %v979
    %v981 = vsub.f32 1.0, %v980
    %v982 = vmul.f32 %v979, %v981
    %v983 = vadd.f32 %v979, %v982
    %vm984 = vweird.f32 %v963
    %vm985 = vweird.f32 %v979
    %vm986 = vmor %vm984, %vm985
    %v987 = vsel %vm986, %v979, %v983
    %v988 = vand.u32 2147483647, %v963
    %vm989 = vcmp.eq.f32.partialorder %v988, 8.507059e+37
    %v990 = vand.u32 %v963, 2147483648
    %v991 = vor.u32 1.1754944e-38, %v990
    %v992 = vsel %vm989, %v991, %v987
    %v993 = vmul.f32 1.0, %v992
    %v994 = vtanh.pop %v954
    %v995 = vtanh.pop %v955
    %v998 = vrot.slane %v906, 7
    %v999 = vrot.slane %v907, 7
    %v1002 = vmul.f32 %v978, %v998
    %v1003 = vmul.f32 %v993, %v999
    %1006 = vrot.lane.b32.xlu0 %v994, 64
    %v1007 = vpop.permute.xlu0 %1006
    %1008 = vrot.lane.b32.xlu0 %v995, 64
    %v1009 = vpop.permute.xlu0 %1008
    %v1012 = vmul.f32 %v978, %v1007
    %v1013 = vmul.f32 %v993, %v1009
    %1016 = vrot.lane.b32.xlu0 %v1012, 32
    %v1017 = vpop.permute.xlu0 %1016
    %1018 = vrot.lane.b32.xlu0 %v1013, 32
    %v1019 = vpop.permute.xlu0 %1018
    %v1022 = vadd.f32 %v1002, %v1017
    %v1023 = vadd.f32 %v1003, %v1019
    %v1024 = vtanh.pop %v1022
    %v1025 = vtanh.pop %v1023
    %1028 = vrot.lane.b32.xlu0 %v1024, 64
    %v1029 = vpop.permute.xlu0 %1028
    %1030 = vrot.lane.b32.xlu0 %v1025, 64
    %v1031 = vpop.permute.xlu0 %1030
    %v1034 = vmul.f32 %v978, %v1029
    %v1035 = vmul.f32 %v993, %v1031
    %v1036 = vld [vmem:[%s5] sm:$0xff]
    %v1037 = vld [vmem:[%s5 + $0x8] sm:$0xff]
    %v1038 = vld [vmem:[%s5 + $0x10] sm:$0xff]
    %v1039 = vld [vmem:[%s5 + $0x18] sm:$0xff]
    %v1040 = vld [vmem:[#allocation5] sm:$0x1]
    %v1042 = vperm.slane %v1040, 0
    %v1046 = vrot.slane %v1034, 7
    %v1047 = vrot.slane %v1035, 6
    %v1048 = vsel %vm229, %v1047, %v1046
    %1049 = vrot.lane.b32.xlu0 %v1048, 32
    %v1050 = vpop.permute.xlu0 %1049
    %v1051 = vsel %vm89, %v1050, 0
    %1053 = vmatpush.msra.mxu0 0.0
    %1054 = vmatpush.msra.mxu0 0.0
    %1055 = vmatpush.msra.mxu0 0.0
    %1056 = vmatpush.msra.mxu0 0.0
    %1057 = vmatpush.msra.mxu0 0.0
    %1058 = vmatpush.msra.mxu0 0.0
    %1059 = vmatpush.msra.mxu0 0.0
    %1060 = vmatpush.msra.mxu0 0.0
    %1061 = vmatpush.msra.mxu0 0.0
    %1062 = vmatpush.msra.mxu0 0.0
    %1063 = vmatpush.msra.mxu0 0.0
    %1064 = vmatpush.msra.mxu0 0.0
    %1065 = vmatpush.msra.mxu0 %v1039
    %1066 = vmatpush.msra.mxu0 %v1038
    %1067 = vmatpush.msra.mxu0 %v1037
    %1068 = vmatpush.msra.mxu0 %v1036
    %1069 = vmatmul.f32.gmra.mxu0 %v1051
    %v1070 = vpop.f32.mrf.mxu0
    %v1071 = vadd.f32 %v1042, %v1070
    %1072 = vdwg.mxu0
    %v1073 = vmul.f32 %v1071, %v1071
    %vm1074 = vcmask 254976
    %v1075 = vsel %vm1074, %v1073, 0.0
    %1076 = vadd.xlane.f32.xlu0 %v1075
    %v1077 = vpop.xlane.xlu0 %1076
    %v1078 = vmax.f32 %v1077, 1e-24
    %v1079 = vrsqrt.pop %v1078
    %v1080 = vmul.f32 %v1079, %v1078
    %v1081 = vmul.f32 %v1080, %v1079
    %v1082 = vmul.f32 0.5, %v1081
    %v1083 = vsub.f32 1.5, %v1082
    %v1084 = vmul.f32 %v1079, %v1083
    %vm1085 = vweird.f32 %v1078
    %vm1086 = vweird.f32 %v1079
    %vm1087 = vmor %vm1085, %vm1086
    %v1088 = vsel %vm1087, %v1079, %v1084
    %v1089 = vmul.f32 %v1071, %v1088
    %1090 = vst.msk [vmem:[#allocation8] sm:$0x3] %vm1074, %v1089
    %v1091 = vld [vmem:[%s1] sm:$0x3]
    %v1092 = vld [vmem:[%s7] sm:$0xff]
    %v1093 = vld [vmem:[%s7 + $0x8] sm:$0xff]
    %v1094 = vld [vmem:[%s7 + $0x10] sm:$0xff]
    %v1095 = vld [vmem:[%s7 + $0x18] sm:$0xff]
    %v1096 = vld [vmem:[%s7 + $0x20] sm:$0xff]
    %v1097 = vld [vmem:[%s7 + $0x28] sm:$0xff]
    %v1098 = vld [vmem:[%s7 + $0x30] sm:$0xff]
    %v1099 = vld [vmem:[%s7 + $0x38] sm:$0xff]
    %v1100 = vld [vmem:[#allocation7] sm:$0x1]
    %v1102 = vperm.slane %v1100, 0
    %vm1104 = vcmask 523264
    %v1106 = vsel %vm1104, %v1091, 0
    %1108 = vmatpush.msra.mxu0 0.0
    %1109 = vmatpush.msra.mxu0 0.0
    %1110 = vmatpush.msra.mxu0 0.0
    %1111 = vmatpush.msra.mxu0 0.0
    %1112 = vmatpush.msra.mxu0 0.0
    %1113 = vmatpush.msra.mxu0 0.0
    %1114 = vmatpush.msra.mxu0 0.0
    %1115 = vmatpush.msra.mxu0 0.0
    %1116 = vmatpush.msra.mxu0 %v1099
    %1117 = vmatpush.msra.mxu0 %v1098
    %1118 = vmatpush.msra.mxu0 %v1097
    %1119 = vmatpush.msra.mxu0 %v1096
    %1120 = vmatpush.msra.mxu0 %v1095
    %1121 = vmatpush.msra.mxu0 %v1094
    %1122 = vmatpush.msra.mxu0 %v1093
    %1123 = vmatpush.msra.mxu0 %v1092
    %1124 = vmatmul.f32.gmra.mxu0 %v1106
    %v1125 = vpop.f32.mrf.mxu0
    %v1126 = vadd.f32 %v1102, %v1125
    %1127 = vdwg.mxu0
    %v1128 = vmul.f32 %v1126, %v1126
    %v1129 = vsel %vm1074, %v1128, 0.0
    %1130 = vadd.xlane.f32.xlu0 %v1129
    %v1131 = vpop.xlane.xlu0 %1130
    %v1132 = vmax.f32 %v1131, 1e-24
    %v1133 = vrsqrt.pop %v1132
    %v1134 = vmul.f32 %v1133, %v1132
    %v1135 = vmul.f32 %v1134, %v1133
    %v1136 = vmul.f32 0.5, %v1135
    %v1137 = vsub.f32 1.5, %v1136
    %v1138 = vmul.f32 %v1133, %v1137
    %vm1139 = vweird.f32 %v1132
    %vm1140 = vweird.f32 %v1133
    %vm1141 = vmor %vm1139, %vm1140
    %v1142 = vsel %vm1141, %v1133, %v1138
    %v1143 = vmul.f32 %v1126, %v1142
    %1144 = vst.msk [vmem:[#allocation9] sm:$0x3] %vm1074, %v1143
    // Predicated region
    $region50: #{model_forward.1} parent=1 // pred_check
      _
    $region51: #{model_forward.1} parent=1 // pred_check_branch
      %1146 = sbr.rel (0) target = $region53
    $region52: #{model_forward.1} parent=1 // pred_region
      %1148 = vsyncadd [#allocation4], 0
      %s1150 = sshll.u32 [#allocation8], 4
      %s1151 = int_to_ptr.vmem [resolvable:$true] %s1150
      %s1152 = sshll.u32 %s9, 4
      %s1153 = int_to_ptr.hbm [resolvable:$true] %s1152
      %1155 = dma.vmem_to_hbm [thread:$0]  %s1151, 32, %s1153, [#allocation4]
    $region53: #{model_forward.1} parent=1 // pred_fallthru
      _
    // Predicated region
    $region54: #{model_forward.1} parent=1 // pred_check
      _
    $region55: #{model_forward.1} parent=1 // pred_check_branch
      %1157 = sbr.rel (0) target = $region57
    $region56: #{model_forward.1} parent=1 // pred_region
      %1159 = vsyncadd [#allocation10], 0
      %s1161 = sshll.u32 [#allocation9], 4
      %s1162 = int_to_ptr.vmem [resolvable:$true] %s1161
      %s1163 = sshll.u32 %s10, 4
      %s1164 = int_to_ptr.hbm [resolvable:$true] %s1163
      %1166 = dma.vmem_to_hbm [thread:$0]  %s1162, 32, %s1164, [#allocation10]
    $region57: #{model_forward.1} parent=1 // pred_fallthru
      _
    // Predicated region
    $region58: #{model_forward.1} parent=1 // pred_check
      _
    $region59: #{model_forward.1} parent=1 // pred_check_branch
      %1168 = sbr.rel (0) target = $region61
    $region60: #{model_forward.1} parent=1 // pred_region
      %1170 = dma.done [#allocation4], 32
    $region61: #{model_forward.1} parent=1 // pred_fallthru
      _
    // Predicated region
    $region62: #{model_forward.1} parent=1 // pred_check
      _
    $region63: #{model_forward.1} parent=1 // pred_check_branch
      %1172 = sbr.rel (0) target = $region65
    $region64: #{model_forward.1} parent=1 // pred_region
      %1174 = dma.done [#allocation10], 32
    $region65: #{model_forward.1} parent=1 // pred_fallthru
      _
    %1175 = vsyncpa [#allocation3], 1
    %1176 = vsyncpa [#allocation6], 1
    %1177 = vsyncpa [#allocation4], 1
    %1178 = vsyncpa [#allocation10], 1

</llo_original>
